<compile_context>
chip_gen: v7x
topology: tpu7x:2x2x1
jax: 0.10.0
libtpu: 0.0.40
codegen_flags: <defaults>
</compile_context>

<pallas_src>
import jax
import jax.numpy as jnp
from jax.experimental import pallas as pl
from jax.experimental.pallas import tpu as pltpu


def _make_kernel(nonlinearity):
    def convblock_kernel(p_ref, w_ref, shift_ref, o_ref):
        # p_ref:     (K, TM)     patch tile (K = k*k*Cin, TM = spatial tile, lane-dense)
        # w_ref:     (Cout, K)   BN-folded conv weights
        # shift_ref: (Cout, 1)   folded bias/BN shift
        # o_ref:     (Cout, TM)  lane-dense output tile
        acc = jnp.dot(w_ref[...], p_ref[...], preferred_element_type=jnp.float32)
        y = acc + shift_ref[...]
        if nonlinearity == "hardswish":
            # Hardswish: x * relu6(x + 3) / 6
            y = y * jnp.clip(y + 3.0, 0.0, 6.0) * (1.0 / 6.0)
        else:  # relu
            y = jnp.maximum(y, 0.0)
        o_ref[...] = y.astype(o_ref.dtype)

    return convblock_kernel


def _pad_and_tile(howo):
    """Pad Ho*Wo up to a multiple of 128 and pick the largest dividing tile
    in {1024, 512, 256, 128} -> output stores are always unmasked, lane-dense."""
    padded = max(128, ((howo + 127) // 128) * 128)
    for t in (1024, 512, 256):
        if padded % t == 0:
            return padded, t
    return padded, 128


def conv_block_forward(x_nchw, weight, bias, gamma, beta, run_mean, run_var,
                       k, eps=1e-3, nonlinearity="hardswish",
                       mxu_dtype=jnp.bfloat16):
    """x_nchw: (N, Cin, H, W). weight: (Cout, Cin, k, k). Returns (N, Cout, Ho, Wo) f32."""
    if nonlinearity not in ("hardswish", "relu"):
        raise ValueError(f"Nonlinearity {nonlinearity} is invalid for ConvBlock.")
    N, Cin, H, W = x_nchw.shape
    Cout = weight.shape[0]
    Ho, Wo = H // k, W // k
    # PyTorch Conv2d with stride == kernel silently truncates any remainder.
    if H != Ho * k or W != Wo * k:
        x_nchw = x_nchw[:, :, :Ho * k, :Wo * k]
    HoWo = Ho * Wo
    K = k * k * Cin

    # Space-to-depth: (N, Cin, H, W) -> (N, K, Ho*Wo), per-patch order (kh, kw, Cin),
    # long spatial axis last (lane-dense input & output blocks; output is NCHW-ordered).
    x = x_nchw.reshape(N, Cin, Ho, k, Wo, k)
    patches = jnp.transpose(x, (0, 3, 5, 1, 2, 4)).reshape(N, K, HoWo)

    # Fold BatchNorm (running stats) and the conv bias into the weights:
    #   y = ((p @ W^T + b) - mean) * gamma/sqrt(var+eps) + beta
    #     = p @ (W * scale)^T + ((b - mean) * scale + beta)
    scale = gamma / jnp.sqrt(run_var + eps)                       # (Cout,)
    shift = (bias - run_mean) * scale + beta                      # (Cout,)
    # (Cout, Cin, kh, kw) -> (Cout, kh, kw, Cin) -> (Cout, K), matching patch ordering.
    w_t = jnp.transpose(weight, (0, 2, 3, 1)).reshape(Cout, K)
    w_folded = (w_t * scale[:, None]).astype(mxu_dtype)

    # Pad the spatial axis to a lane-aligned tile (zeros are sliced off afterwards).
    HoWo_pad, TM = _pad_and_tile(HoWo)
    if HoWo_pad != HoWo:
        patches = jnp.pad(patches, ((0, 0), (0, 0), (0, HoWo_pad - HoWo)))

    patches = patches.astype(mxu_dtype)
    shift2d = shift.reshape(Cout, 1).astype(jnp.float32)

    grid = (N, HoWo_pad // TM)

    in_bytes = jnp.dtype(mxu_dtype).itemsize
    # double-buffered patch tile + double-buffered output tile + resident weights/shift
    tile_bytes = (2 * K * TM * in_bytes + 2 * Cout * TM * 4
                  + Cout * K * in_bytes + Cout * 4)
    vmem_limit = int(min(max(4 * tile_bytes, 16 << 20), 48 << 20))

    out3d = pl.pallas_call(
        _make_kernel(nonlinearity),
        grid=grid,
        in_specs=[
            pl.BlockSpec((None, K, TM), lambda n, m: (n, 0, m)),   # patches
            pl.BlockSpec((Cout, K), lambda n, m: (0, 0)),          # folded weights
            pl.BlockSpec((Cout, 1), lambda n, m: (0, 0)),          # folded shift
        ],
        out_specs=pl.BlockSpec((None, Cout, TM), lambda n, m: (n, 0, m)),
        out_shape=jax.ShapeDtypeStruct((N, Cout, HoWo_pad), jnp.float32),
        compiler_params=pltpu.CompilerParams(
            dimension_semantics=("parallel", "parallel"),
            vmem_limit_bytes=vmem_limit,
            allow_input_fusion=[True, False, False],
        ),
        cost_estimate=pl.CostEstimate(
            flops=2 * N * HoWo_pad * K * Cout,
            transcendentals=0,
            bytes_accessed=(N * K * HoWo_pad + Cout * K) * in_bytes
                           + Cout * 4 + N * Cout * HoWo_pad * 4,
        ),
    )(patches, w_folded, shift2d)

    # Drop spatial padding; (N, Cout, Ho*Wo) is already NCHW-ordered.
    out3d = out3d[:, :, :HoWo]
    return out3d.reshape(N, Cout, Ho, Wo)


def conv_block_reference(x_nchw, weight, bias, gamma, beta, run_mean, run_var,
                         k, eps=1e-3, nonlinearity="hardswish"):
    """Pure-JAX f32 reference using lax.conv for validation."""
    y = jax.lax.conv_general_dilated(
        x_nchw, weight, window_strides=(k, k), padding="VALID",
        dimension_numbers=("NCHW", "OIHW", "NCHW"))
    y = y + bias[None, :, None, None]
    scale = gamma / jnp.sqrt(run_var + eps)
    shift = beta - run_mean * scale
    y = y * scale[None, :, None, None] + shift[None, :, None, None]
    if nonlinearity == "hardswish":
        return y * jnp.clip(y + 3.0, 0.0, 6.0) / 6.0
    return jnp.maximum(y, 0.0)


if __name__ == "__main__":
    key = jax.random.PRNGKey(0)
    N, Cin, H, W = 2, 4, 16, 16
    Cout, k = 8, 4

    ks = jax.random.split(key, 7)
    x = jax.random.normal(ks[0], (N, Cin, H, W), dtype=jnp.float32)
    weight = 0.1 * jax.random.normal(ks[1], (Cout, Cin, k, k), dtype=jnp.float32)
    bias = 0.1 * jax.random.normal(ks[2], (Cout,), dtype=jnp.float32)
    gamma = 1.0 + 0.1 * jax.random.normal(ks[3], (Cout,), dtype=jnp.float32)
    beta = 0.1 * jax.random.normal(ks[4], (Cout,), dtype=jnp.float32)
    run_mean = 0.1 * jax.random.normal(ks[5], (Cout,), dtype=jnp.float32)
    run_var = jnp.abs(1.0 + 0.1 * jax.random.normal(ks[6], (Cout,), dtype=jnp.float32))

    # --- Hardswish (module default) ---
    ref = conv_block_reference(x, weight, bias, gamma, beta, run_mean, run_var, k)

    # Strict numerical check with f32 MXU inputs.
    out_f32 = conv_block_forward(x, weight, bias, gamma, beta, run_mean, run_var, k,
                                 mxu_dtype=jnp.float32)
    out_f32 = jax.block_until_ready(out_f32)
    assert out_f32.shape == (N, Cout, H // k, W // k), out_f32.shape
    assert jnp.allclose(out_f32, ref, atol=1e-4, rtol=1e-4), \
        float(jnp.max(jnp.abs(out_f32 - ref)))

    # Fast path: bf16 MXU inputs (default), f32 accumulation/epilogue.
    out_bf16 = conv_block_forward(x, weight, bias, gamma, beta, run_mean, run_var, k)
    out_bf16 = jax.block_until_ready(out_bf16)
    assert out_bf16.shape == (N, Cout, H // k, W // k), out_bf16.shape
    assert jnp.allclose(out_bf16, ref, atol=5e-2, rtol=5e-2), \
        float(jnp.max(jnp.abs(out_bf16 - ref)))

    # --- ReLU variant (also supported by the module) ---
    ref_relu = conv_block_reference(x, weight, bias, gamma, beta, run_mean, run_var, k,
                                    nonlinearity="relu")
    out_relu = conv_block_forward(x, weight, bias, gamma, beta, run_mean, run_var, k,
                                  nonlinearity="relu", mxu_dtype=jnp.float32)
    out_relu = jax.block_until_ready(out_relu)
    assert jnp.allclose(out_relu, ref_relu, atol=1e-4, rtol=1e-4), \
        float(jnp.max(jnp.abs(out_relu - ref_relu)))

    print("KERNEL_OK")
</pallas_src>

<mosaic_0001>
module attributes {stable_mosaic.version = 11 : i64} {
  func.func @convblock_kernel(%arg0: i32, %arg1: i32, %arg2: memref<1x64x128xf32, #tpu.memory_space<vmem>>, %arg3: memref<8x64xf32, #tpu.memory_space<vmem>>, %arg4: memref<8x1xf32, #tpu.memory_space<vmem>>, %arg5: memref<1x8x128xf32, #tpu.memory_space<vmem>>) attributes {dimension_semantics = [#tpu.dimension_semantics<parallel>, #tpu.dimension_semantics<parallel>], iteration_bounds = array<i64: 2, 1>, scalar_prefetch = 0 : i64, scratch_operands = 0 : i64, tpu.core_type = #tpu.core_type<tc>, window_params = [{transform_indices = @transform_0, window_bounds = array<i64: 1, 64, 128>}, {pipeline_mode = #tpu.pipeline_mode<synchronous>, transform_indices = @transform_1, window_bounds = array<i64: 8, 64>}, {pipeline_mode = #tpu.pipeline_mode<synchronous>, transform_indices = @transform_2, window_bounds = array<i64: 8, 1>}, {transform_indices = @transform_3, window_bounds = array<i64: 1, 8, 128>}]} {
    %c0 = arith.constant 0 : index
    %c0_0 = arith.constant 0 : index
    %0 = vector.load %arg3[%c0, %c0_0] : memref<8x64xf32, #tpu.memory_space<vmem>>, vector<8x64xf32>
    %c0_1 = arith.constant 0 : index
    %c0_2 = arith.constant 0 : index
    %c0_3 = arith.constant 0 : index
    %1 = vector.load %arg2[%c0_1, %c0_2, %c0_3] : memref<1x64x128xf32, #tpu.memory_space<vmem>>, vector<1x64x128xf32>
    %2 = vector.shape_cast %1 : vector<1x64x128xf32> to vector<64x128xf32>
    %cst = arith.constant dense<0.000000e+00> : vector<8x128xf32>
    %3 = tpu.matmul %0, %2, %cst {dimension_numbers = #tpu.dot_dimension_numbers<[1], [0], [0], [1], [0, 0, 1, 1], [], []>} : vector<8x64xf32>, vector<64x128xf32>, vector<8x128xf32> -> vector<8x128xf32>
    %c0_4 = arith.constant 0 : index
    %c0_5 = arith.constant 0 : index
    %4 = vector.load %arg4[%c0_4, %c0_5] : memref<8x1xf32, #tpu.memory_space<vmem>>, vector<8x1xf32>
    %5 = vector.broadcast %4 : vector<8x1xf32> to vector<8x128xf32>
    %6 = arith.addf %3, %5 : vector<8x128xf32>
    %cst_6 = arith.constant 3.000000e+00 : f32
    %7 = vector.broadcast %cst_6 : f32 to vector<8x128xf32>
    %8 = arith.addf %6, %7 : vector<8x128xf32>
    %cst_7 = arith.constant 0.000000e+00 : f32
    %cst_8 = arith.constant 6.000000e+00 : f32
    %9 = vector.broadcast %cst_7 : f32 to vector<8x128xf32>
    %10 = arith.maximumf %9, %8 : vector<8x128xf32>
    %11 = vector.broadcast %cst_8 : f32 to vector<8x128xf32>
    %12 = arith.minimumf %11, %10 : vector<8x128xf32>
    %13 = arith.mulf %6, %12 : vector<8x128xf32>
    %cst_9 = arith.constant 0.166666672 : f32
    %14 = vector.broadcast %cst_9 : f32 to vector<8x128xf32>
    %15 = arith.mulf %13, %14 : vector<8x128xf32>
    %c0_10 = arith.constant 0 : index
    %c0_11 = arith.constant 0 : index
    %c0_12 = arith.constant 0 : index
    %16 = vector.load %arg5[%c0_10, %c0_11, %c0_12] : memref<1x8x128xf32, #tpu.memory_space<vmem>>, vector<1x8x128xf32>
    %17 = vector.shape_cast %16 : vector<1x8x128xf32> to vector<8x128xf32>
    %18 = vector.shape_cast %15 : vector<8x128xf32> to vector<1x8x128xf32>
    tpu.vector_store %arg5[%c0_10, %c0_11, %c0_12], %18 {strides = array<i32>} : memref<1x8x128xf32, #tpu.memory_space<vmem>>, vector<1x8x128xf32>,
    return
  }
  func.func @transform_0(%arg0: i32, %arg1: i32) -> (i32, i32, i32) {
    %c0_i32 = arith.constant 0 : i32
    %c0_i32_0 = arith.constant 0 : i32
    return %arg0, %c0_i32, %arg1 : i32, i32, i32
  }
  func.func @transform_1(%arg0: i32, %arg1: i32) -> (i32, i32) {
    %c0_i32 = arith.constant 0 : i32
    %c0_i32_0 = arith.constant 0 : i32
    %c0_i32_1 = arith.constant 0 : i32
    return %c0_i32, %c0_i32_0 : i32, i32
  }
  func.func @transform_2(%arg0: i32, %arg1: i32) -> (i32, i32) {
    %c0_i32 = arith.constant 0 : i32
    %c0_i32_0 = arith.constant 0 : i32
    %c0_i32_1 = arith.constant 0 : i32
    return %c0_i32, %c0_i32_0 : i32, i32
  }
  func.func @transform_3(%arg0: i32, %arg1: i32) -> (i32, i32, i32) {
    %c0_i32 = arith.constant 0 : i32
    %c0_i32_0 = arith.constant 0 : i32
    return %arg0, %c0_i32, %arg1 : i32, i32, i32
  }
}

</mosaic_0001>

<llo_original>
// kernel: tpu_custom_call.1
$region0: #{tpu_custom_call.1}
  #allocation0 [shape = 'u32[]', space=smem, size = 0x4, offset = 0x4, fixed_abs, tag = 'smem constant byte address 0x4 - core index']
  #allocation1 [shape = 'u32[144,128]{1,0:T(1,128)}', space=vmem, size = 0x12000, scoped, tag = 'internal scratch']
  %s0 = inlined_call_operand.hbm [shape: f32[2,64,128], index: 0, kind: input, shape index: {}]
  %s1 = inlined_call_operand.vmem [shape: f32[8,64], index: 1, kind: input, shape index: {}]
  %s2 = inlined_call_operand.vmem [shape: f32[8,1], index: 2, kind: input, shape index: {}]
  %s3 = inlined_call_operand.hbm [shape: f32[2,8,128], index: 3, kind: output, shape index: {}]
  %s4 = sld [smem:[#allocation0]]
  $region49: #{tpu_custom_call.1} parent=0
    _
  %s6 = ssub.s32 1, %s4
  %s7 = scalar_select 0, %s6, %s4
  $region1: #{tpu_custom_call.1} parent=0
    #allocation2 [shape = 'u8[65536]{0}', space=vmem, size = 0x10000, scoped, tag = 'input window, operand 0']
    #allocation3 [shape = 's32[2]{0}', space=sflag, size = 0x8, scoped, tag = 'scoped memory for tpu_custom_call.1']
    #allocation4 [shape = 's32[2]{0}', space=sflag, size = 0x8, scoped, tag = 'scoped memory for tpu_custom_call.1']
    #allocation5 [shape = 'u8[8192]{0}', space=vmem, size = 0x2000, scoped, tag = 'output window, operand 0']
    %8 = vsyncpa [#allocation3], 0
    %s9 = scalar_lea.sflag [#allocation3], 1
    %10 = vsyncpa %s9, 0
    %11 = vsyncpa [#allocation4], 0
    %s12 = scalar_lea.sflag [#allocation4], 1
    %13 = vsyncpa %s12, 0
    loop: start=0, step=1, limit=4
    $region2: #{tpu_custom_call.1} parent=1 // loop_pre_header
      _
    $region3: #{tpu_custom_call.1} parent=1 // loop_header
      %s15 = sphi 0, %s19
      %p16 = scmp.ge.s32.totalorder %s15, 4
      %s22 = sphi 0, %s34
      %s23 = sphi 0, %s30
      %s24 = sphi 0, %s22
      %s25 = sphi 0, %s23
      %s26 = sphi 0, %s24
      %s27 = sphi 0, %s25
      %s39 = sphi 0, %s41
      %s42 = sphi 0, %s39
      %s43 = sphi 0, %s42
      %s59 = sphi 0, %s43
      %s63 = sphi 0, %s63
      %s65 = sphi 0, %s63
      %s66 = sphi 0, %s65
      %s80 = sphi 0, %s66
      %s84 = sphi 0, %s84
      %s86 = sphi 0, %s84
      %s87 = sphi 0, %s86
      %s101 = sphi 0, %s87
      %s109 = sphi 0, %s111
      %s112 = sphi 0, %s109
      %s113 = sphi 0, %s112
      %s129 = sphi 0, %s113
    $region4: #{tpu_custom_call.1} parent=1 // loop_header_branch
      %18 = sbr.rel (%p16) target = $region8
    $region5: #{tpu_custom_call.1} parent=1 // loop_body
      %s20 = ssub.s32 %s15, 1
      %s21 = ssub.s32 %s15, 2
      %s28 = sadd.s32 1, %s23
      %p29 = scmp.ge.s32.totalorder %s28, 1
      %s30 = scalar_select %p29, 0, %s28
      %s31 = sadd.s32 1, %s22
      %s32 = scalar_select %p29, %s31, %s22
      %p33 = scmp.ge.s32.totalorder %s32, 2
      %s34 = scalar_select %p33, 0, %s32
      %s35 = ssub.s32 %s22, %s34
      %s36 = ssub.s32 %s23, %s30
      %s37 = sor.u32 %s35, %s36
      %p38 = scmp.eq.s32.totalorder %s37, 0
      %s40 = sadd.s32 %s39, 1
      %s41 = scalar_select %p38, %s39, %s40
      %p44 = pneg %p38
      %p45 = scmp.eq.s32.totalorder %s15, 1
      %p46 = por %p44, %p45
      %p47 = scmp.ne.s32.totalorder %s39, %s42
      %p48 = scmp.eq.s32.totalorder %s15, 0
      %p49 = por %p47, %p48
      %p50 = scmp.ne.s32.totalorder %s39, %s42
      %p51 = scmp.eq.s32.totalorder %s20, 1
      %p52 = por %p50, %p51
      %p53 = scmp.ne.s32.totalorder %s42, %s43
      %p54 = scmp.eq.s32.totalorder %s20, 0
      %p55 = por %p53, %p54
      %p56 = scmp.ne.s32.totalorder %s42, %s43
      %p57 = scmp.eq.s32.totalorder %s21, 1
      %p58 = por %p56, %p57
      %p60 = scmp.ne.s32.totalorder %s43, %s59
      %p61 = scmp.eq.s32.totalorder %s21, 0
      %p62 = por %p60, %p61
      %s64 = sadd.s32 %s63, 1
      %p67 = scmp.eq.s32.totalorder %s15, 1
      %p68 = scmp.ne.s32.totalorder %s63, %s65
      %p69 = scmp.eq.s32.totalorder %s15, 0
      %p70 = por %p68, %p69
      %p71 = scmp.ne.s32.totalorder %s63, %s65
      %p72 = scmp.eq.s32.totalorder %s20, 1
      %p73 = por %p71, %p72
      %p74 = scmp.ne.s32.totalorder %s65, %s66
      %p75 = scmp.eq.s32.totalorder %s20, 0
      %p76 = por %p74, %p75
      %p77 = scmp.ne.s32.totalorder %s65, %s66
      %p78 = scmp.eq.s32.totalorder %s21, 1
      %p79 = por %p77, %p78
      %p81 = scmp.ne.s32.totalorder %s66, %s80
      %p82 = scmp.eq.s32.totalorder %s21, 0
      %p83 = por %p81, %p82
      %s85 = sadd.s32 %s84, 1
      %p88 = scmp.eq.s32.totalorder %s15, 1
      %p89 = scmp.ne.s32.totalorder %s84, %s86
      %p90 = scmp.eq.s32.totalorder %s15, 0
      %p91 = por %p89, %p90
      %p92 = scmp.ne.s32.totalorder %s84, %s86
      %p93 = scmp.eq.s32.totalorder %s20, 1
      %p94 = por %p92, %p93
      %p95 = scmp.ne.s32.totalorder %s86, %s87
      %p96 = scmp.eq.s32.totalorder %s20, 0
      %p97 = por %p95, %p96
      %p98 = scmp.ne.s32.totalorder %s86, %s87
      %p99 = scmp.eq.s32.totalorder %s21, 1
      %p100 = por %p98, %p99
      %p102 = scmp.ne.s32.totalorder %s87, %s101
      %p103 = scmp.eq.s32.totalorder %s21, 0
      %p104 = por %p102, %p103
      %s105 = ssub.s32 %s22, %s34
      %s106 = ssub.s32 %s23, %s30
      %s107 = sor.u32 %s105, %s106
      %p108 = scmp.eq.s32.totalorder %s107, 0
      %s110 = sadd.s32 %s109, 1
      %s111 = scalar_select %p108, %s109, %s110
      %p114 = pneg %p108
      %p115 = scmp.eq.s32.totalorder %s15, 1
      %p116 = por %p114, %p115
      %p117 = scmp.ne.s32.totalorder %s109, %s112
      %p118 = scmp.eq.s32.totalorder %s15, 0
      %p119 = por %p117, %p118
      %p120 = scmp.ne.s32.totalorder %s109, %s112
      %p121 = scmp.eq.s32.totalorder %s20, 1
      %p122 = por %p120, %p121
      %p123 = scmp.ne.s32.totalorder %s112, %s113
      %p124 = scmp.eq.s32.totalorder %s20, 0
      %p125 = por %p123, %p124
      %p126 = scmp.ne.s32.totalorder %s112, %s113
      %p127 = scmp.eq.s32.totalorder %s21, 1
      %p128 = por %p126, %p127
      %p130 = scmp.ne.s32.totalorder %s113, %s129
      %p131 = scmp.eq.s32.totalorder %s21, 0
      %p132 = por %p130, %p131
      %p133 = scmp.le.s32.totalorder 1, %s15
      %p134 = scmp.lt.s32.totalorder %s15, 3
      %p135 = pnand %p133, %p134
      %p136 = pneg %p135
      // Predicated region
      $region9: #{tpu_custom_call.1} parent=5 // pred_check
        _
      $region10: #{tpu_custom_call.1} parent=5 // pred_check_branch
        %138 = sbr.rel (%p135) target = $region12
      $region11: #{tpu_custom_call.1} parent=5 // pred_region
        %s139 = ssub.s32 %s15, 1
        // Predicated region
        $region13: #{tpu_custom_call.1} parent=11 // pred_check
          %p140 = pneg %p76
        $region14: #{tpu_custom_call.1} parent=11 // pred_check_branch
          %142 = sbr.rel (%p140) target = $region16
        $region15: #{tpu_custom_call.1} parent=11 // pred_region
          _
        $region16: #{tpu_custom_call.1} parent=11 // pred_fallthru
          _
        // Predicated region
        $region17: #{tpu_custom_call.1} parent=11 // pred_check
          %p143 = pneg %p97
        $region18: #{tpu_custom_call.1} parent=11 // pred_check_branch
          %145 = sbr.rel (%p143) target = $region20
        $region19: #{tpu_custom_call.1} parent=11 // pred_region
          _
        $region20: #{tpu_custom_call.1} parent=11 // pred_fallthru
          _
      $region12: #{tpu_custom_call.1} parent=5 // pred_fallthru
        _
      %p146 = scmp.lt.s32.totalorder %s15, 2
      // Predicated region
      $region21: #{tpu_custom_call.1} parent=5 // pred_check
        %p147 = pneg %p146
      $region22: #{tpu_custom_call.1} parent=5 // pred_check_branch
        %149 = sbr.rel (%p147) target = $region24
      $region23: #{tpu_custom_call.1} parent=5 // pred_region
        // Predicated region
        $region25: #{tpu_custom_call.1} parent=23 // pred_check
          %p150 = pneg %p49
        $region26: #{tpu_custom_call.1} parent=23 // pred_check_branch
          %152 = sbr.rel (%p150) target = $region28
        $region27: #{tpu_custom_call.1} parent=23 // pred_region
          %s153 = sand.u32 %s39, 1
          %s154 = scalar_lea.sflag [#allocation3], %s153
          %s155 = sand.u32 %s39, 1
          %s156 = smul.addr %s155, 64
          %s157 = scalar_lea.vmem [#allocation2], %s156
          %s159 = ssub.s32 1024, 1024
          %160 = vsyncadd %s154, %s159
          %s161 = smul.addr %s22, 8
          %s162 = sadd.s32 %s23, %s161
          %s163 = smul.addr %s162, 128
          %s164 = scalar_lea.hbm %s0, %s163
          %s165 = sshll.u32 %s157, 4
          %s166 = int_to_ptr.vmem [resolvable:$true] %s165
          %171 = dma.hbm_to_vmem [thread:$0]  %s164, 1024, %s166, %s154, 128, 128, 8
        $region28: #{tpu_custom_call.1} parent=23 // pred_fallthru
          _
      $region24: #{tpu_custom_call.1} parent=5 // pred_fallthru
        _
      %p172 = scmp.le.s32.totalorder 1, %s15
      %p173 = scmp.lt.s32.totalorder %s15, 3
      %p174 = pnand %p172, %p173
      %p175 = pneg %p174
      // Predicated region
      $region29: #{tpu_custom_call.1} parent=5 // pred_check
        _
      $region30: #{tpu_custom_call.1} parent=5 // pred_check_branch
        %177 = sbr.rel (%p174) target = $region32
      $region31: #{tpu_custom_call.1} parent=5 // pred_region
        %s178 = ssub.s32 %s15, 1
        %s179 = sand.u32 %s42, 1
        %s180 = scalar_lea.sflag [#allocation3], %s179
        %s181 = sand.u32 %s42, 1
        %s182 = smul.addr %s181, 64
        %s183 = scalar_lea.vmem [#allocation2], %s182
        // Predicated region
        $region33: #{tpu_custom_call.1} parent=31 // pred_check
          %p184 = pneg %p55
        $region34: #{tpu_custom_call.1} parent=31 // pred_check_branch
          %186 = sbr.rel (%p184) target = $region36
        $region35: #{tpu_custom_call.1} parent=31 // pred_region
          %187 = dma.done %s180, 1024
        $region36: #{tpu_custom_call.1} parent=31 // pred_fallthru
          _
        %s188 = sand.u32 %s42, 1
        %s189 = scalar_lea.sflag [#allocation3], %s188
        %s190 = sand.u32 %s42, 1
        %s191 = smul.addr %s190, 64
        %s192 = scalar_lea.vmem [#allocation2], %s191
        %p193 = pneg %p55
        %p194 = pneg %p52
        %p195 = pneg %p76
        %p196 = pneg %p73
        %p197 = pneg %p97
        %p198 = pneg %p94
        %p199 = pneg %p125
        %p200 = pneg %p122
        %s201 = sand.u32 %s112, 1
        %s202 = scalar_lea.sflag [#allocation4], %s201
        %s203 = sand.u32 %s112, 1
        %s204 = smul.addr %s203, 8
        %s205 = scalar_lea.vmem [#allocation5], %s204
        %v206 = vld [vmem:[%s1] sm:$0xff]
        %v207 = vld [vmem:[%s183] sm:$0xff]
        %v208 = vld [vmem:[%s183 + $0x8] sm:$0xff]
        %v209 = vld [vmem:[%s183 + $0x10] sm:$0xff]
        %v210 = vld [vmem:[%s183 + $0x18] sm:$0xff]
        %v211 = vld [vmem:[%s183 + $0x20] sm:$0xff]
        %v212 = vld [vmem:[%s183 + $0x28] sm:$0xff]
        %v213 = vld [vmem:[%s183 + $0x30] sm:$0xff]
        %v214 = vld [vmem:[%s183 + $0x38] sm:$0xff]
        %v215 = vld [vmem:[%s2] sm:$0xff]
        %217 = vset.pattern.permute.xlu0 0
        %218 = vperm.xlu0 %217, %v215
        %v219 = vpop.permute.xlu0 %218
        %vm221 = vcmask 523264
        %v223 = vsel %vm221, %v206, 0
        %225 = vmatprep.subr.mxu0 0.0
        %226 = vmatpush1.msra.mxu0 %v207
        %227 = vmatprep.subr.mxu0 0.0
        %228 = vmatpush1.msra.mxu0 %v208
        %229 = vmatprep.subr.mxu0 0.0
        %230 = vmatpush1.msra.mxu0 %v209
        %231 = vmatprep.subr.mxu0 0.0
        %232 = vmatpush1.msra.mxu0 %v210
        %233 = vmatprep.subr.mxu0 0.0
        %234 = vmatpush1.msra.mxu0 %v211
        %235 = vmatprep.subr.mxu0 0.0
        %236 = vmatpush1.msra.mxu0 %v212
        %237 = vmatprep.subr.mxu0 0.0
        %238 = vmatpush1.msra.mxu0 %v213
        %239 = vmatprep.subr.mxu0 0.0
        %240 = vmatpush1.msra.mxu0 %v214
        %241 = vmatprep.subr.mxu0 0.0
        %242 = vmatpush1.msra.mxu0 0.0
        %243 = vmatprep.subr.mxu0 0.0
        %244 = vmatpush1.msra.mxu0 0.0
        %245 = vmatprep.subr.mxu0 0.0
        %246 = vmatpush1.msra.mxu0 0.0
        %247 = vmatprep.subr.mxu0 0.0
        %248 = vmatpush1.msra.mxu0 0.0
        %249 = vmatprep.subr.mxu0 0.0
        %250 = vmatpush1.msra.mxu0 0.0
        %251 = vmatprep.subr.mxu0 0.0
        %252 = vmatpush1.msra.mxu0 0.0
        %253 = vmatprep.subr.mxu0 0.0
        %254 = vmatpush1.msra.mxu0 0.0
        %255 = vmatprep.subr.mxu0 0.0
        %256 = vmatpush1.msra.mxu0 0.0
        %257 = vmatprep.subr.mxu0 0.0
        %258 = vmatpush1.msra.mxu0 0.0
        %259 = vmatprep.subr.mxu0 0.0
        %260 = vmatpush1.msra.mxu0 0.0
        %261 = vmatprep.subr.mxu0 0.0
        %262 = vmatpush1.msra.mxu0 0.0
        %263 = vmatprep.subr.mxu0 0.0
        %264 = vmatpush1.msra.mxu0 0.0
        %265 = vmatprep.subr.mxu0 0.0
        %266 = vmatpush1.msra.mxu0 0.0
        %267 = vmatprep.subr.mxu0 0.0
        %268 = vmatpush1.msra.mxu0 0.0
        %269 = vmatprep.subr.mxu0 0.0
        %270 = vmatpush1.msra.mxu0 0.0
        %271 = vmatprep.subr.mxu0 0.0
        %272 = vmatpush1.msra.mxu0 0.0
        %273 = vmatprep.subr.mxu0 0.0
        %274 = vmatpush1.msra.mxu0 0.0
        %275 = vmatprep.subr.mxu0 0.0
        %276 = vmatpush1.msra.mxu0 0.0
        %277 = vmatprep.subr.mxu0 0.0
        %278 = vmatpush1.msra.mxu0 0.0
        %279 = vmatprep.subr.mxu0 0.0
        %280 = vmatpush1.msra.mxu0 0.0
        %281 = vmatprep.subr.mxu0 0.0
        %282 = vmatpush1.msra.mxu0 0.0
        %283 = vmatprep.subr.mxu0 0.0
        %284 = vmatpush1.msra.mxu0 0.0
        %285 = vmatprep.subr.mxu0 0.0
        %286 = vmatpush1.msra.mxu0 0.0
        %287 = vmatprep.subr.mxu0 0.0
        %288 = vmatpush1.msra.mxu0 0.0
        %289 = vmatprep.mubr.f32.mxu0 0.0
        %290 = vmatmul.mubr.f32.gmra.mrb[0].mxu0 %v223
        %v291 = vpop.f32.mrb[0].mxu0
        %v292 = vadd.f32 %v219, %v291
        %v293 = vpop.f32.mrb[0].mxu0
        %294 = vdwg.mxu0
        %v295 = vadd.f32 %v292, 3.0
        %v296 = vmax.f32 %v295, 0.0
        %v297 = vmin.f32 %v296, 6.0
        %v298 = vmul.f32 %v292, %v297
        %v299 = vmul.f32 %v298, 0.16666667
        %300 = vst [vmem:[%s205] sm:$0xff] %v299
        %s301 = sand.u32 %s112, 1
        %s302 = scalar_lea.sflag [#allocation4], %s301
        %s303 = sand.u32 %s112, 1
        %s304 = smul.addr %s303, 8
        %s305 = scalar_lea.vmem [#allocation5], %s304
        // Predicated region
        $region37: #{tpu_custom_call.1} parent=31 // pred_check
          %p306 = pneg %p122
        $region38: #{tpu_custom_call.1} parent=31 // pred_check_branch
          %308 = sbr.rel (%p306) target = $region40
        $region39: #{tpu_custom_call.1} parent=31 // pred_region
          %s310 = ssub.s32 128, 128
          %311 = vsyncadd %s302, %s310
          %s312 = sadd.s32 %s25, %s24
          %s313 = smul.addr %s312, 128
          %s314 = scalar_lea.hbm %s3, %s313
          %s316 = sshll.u32 %s305, 4
          %s317 = int_to_ptr.vmem [resolvable:$true] %s316
          %319 = dma.vmem_to_hbm [thread:$0]  %s317, 128, %s314, %s302
        $region40: #{tpu_custom_call.1} parent=31 // pred_fallthru
          _
      $region32: #{tpu_custom_call.1} parent=5 // pred_fallthru
        _
      %p320 = scmp.le.s32.totalorder 2, %s15
      // Predicated region
      $region41: #{tpu_custom_call.1} parent=5 // pred_check
        %p321 = pneg %p320
      $region42: #{tpu_custom_call.1} parent=5 // pred_check_branch
        %323 = sbr.rel (%p321) target = $region44
      $region43: #{tpu_custom_call.1} parent=5 // pred_region
        %s324 = ssub.s32 %s15, 2
        // Predicated region
        $region45: #{tpu_custom_call.1} parent=43 // pred_check
          %p325 = pneg %p128
        $region46: #{tpu_custom_call.1} parent=43 // pred_check_branch
          %327 = sbr.rel (%p325) target = $region48
        $region47: #{tpu_custom_call.1} parent=43 // pred_region
          %s328 = sand.u32 %s113, 1
          %s329 = scalar_lea.sflag [#allocation4], %s328
          %s330 = sand.u32 %s113, 1
          %s331 = smul.addr %s330, 8
          %s332 = scalar_lea.vmem [#allocation5], %s331
          %333 = dma.done %s329, 128
        $region48: #{tpu_custom_call.1} parent=43 // pred_fallthru
          _
      $region44: #{tpu_custom_call.1} parent=5 // pred_fallthru
        _
    $region6: #{tpu_custom_call.1} parent=1 // loop_footer
      %s19 = sadd.s32 1, %s15
    $region7: #{tpu_custom_call.1} parent=1 // loop_footer_branch
      %14 = sbr.rel target = $region3
    $region8: #{tpu_custom_call.1} parent=1 // loop_exit
      _
    %334 = vsyncpa [#allocation3], 1
    %s335 = scalar_lea.sflag [#allocation3], 1
    %336 = vsyncpa %s335, 1
    %337 = vsyncpa [#allocation4], 1
    %s338 = scalar_lea.sflag [#allocation4], 1
    %339 = vsyncpa %s338, 1

</llo_original>
